<compile_context>
chip_gen: v6e
topology: v6e:2x2x1
jax: 0.10.0
libtpu: 0.0.40
codegen_flags: <defaults>
</compile_context>

<pallas_src>
import functools

import jax
import jax.numpy as jnp
import numpy as np
from jax.experimental import pallas as pl
from jax.experimental.pallas import tpu as pltpu

_STATS_W = 128                      # lane-dense width of the packed per-sample stats row
_TARGET_CHUNK = 65536               # preferred number of pixels (lanes) per grid step
_VMEM_INPUT_BUDGET = 6 * 1024 * 1024  # double-buffered input blocks per step (bytes)


def _round_up(x, m):
    return ((x + m - 1) // m) * m


def _choose_chunk(P, bytes_per_pixel_db):
    """Largest 128-multiple pixel chunk <= _TARGET_CHUNK that keeps the
    double-buffered input blocks within the VMEM budget (portable across
    v5e/v6e/v7x default scoped VMEM limits)."""
    target = min(_TARGET_CHUNK, max(128, _VMEM_INPUT_BUDGET // max(1, bytes_per_pixel_db)))
    target = max(128, (target // 128) * 128)
    return min(target, _round_up(P, 128))


def _build_kernel(C, Pt, P, padded):
    """Kernel closure over static config.

    Refs:
      ed_ref / es_ref : (1, C, Pt) logits (any float dtype; upcast in-kernel)
      gt_ref          : (1, 2, Pt) integer labels (row 0 = ED, row 1 = ES)
      out_ref         : (1, 2, _STATS_W) f32 packed stats (written at finalize)
      acc_ref         : (2, C, 4) f32 scratch: lanes [inter, psum, gsum, ce]
    """

    def kernel(ed_ref, es_ref, gt_ref, out_ref, acc_ref):
        k = pl.program_id(2)
        num_k = pl.num_programs(2)

        @pl.when(k == 0)
        def _():
            acc_ref[...] = jnp.zeros_like(acc_ref)

        # Iotas hoisted: built once per chunk, shared by both streams.
        cls = jax.lax.broadcasted_iota(jnp.int32, (C, Pt), 0)
        cls_col = jax.lax.broadcasted_iota(jnp.int32, (C, 1), 0)

        if padded:
            # Mask out host-side padding pixels (only emitted when P % Pt != 0).
            start = (pl.program_id(1) * num_k + k) * Pt
            lane = jax.lax.broadcasted_iota(jnp.int32, (1, Pt), 1)
            valid = (lane + start) < P                                   # (1, Pt)
        else:
            valid = None

        gt_all = gt_ref[0].astype(jnp.int32)                             # (2, Pt)

        def accumulate(s, logits_raw, gt_row):
            # Raw per-chunk statistics in their natural (C, 1)/(1, 1) shapes;
            # lane-dense packing is deferred to the finalize step.
            logits = logits_raw.astype(jnp.float32)                      # (C, Pt)
            m = jnp.max(logits, axis=0, keepdims=True)                   # (1, Pt)
            lse = m + jnp.log(jnp.sum(jnp.exp(logits - m), axis=0, keepdims=True))
            is_gt = cls == gt_row                                        # (C, Pt)
            at_gt = jnp.sum(jnp.where(is_gt, logits, 0.0), axis=0, keepdims=True)
            ce_px = lse - at_gt                                          # (1, Pt)

            # argmax over classes (first maximal index, like torch.max(dim=1)[1])
            pred = jnp.min(jnp.where(logits == m, cls, C), axis=0, keepdims=True)
            is_pred = cls == pred                                        # (C, Pt)

            if valid is not None:
                ce_px = jnp.where(valid, ce_px, 0.0)
                is_gt = jnp.logical_and(is_gt, valid)
                is_pred = jnp.logical_and(is_pred, valid)

            ce = jnp.sum(ce_px, axis=1, keepdims=True)                   # (1, 1)
            inter = jnp.sum(jnp.where(jnp.logical_and(is_pred, is_gt), 1.0, 0.0),
                            axis=1, keepdims=True)                       # (C, 1)
            psum = jnp.sum(jnp.where(is_pred, 1.0, 0.0), axis=1, keepdims=True)
            gsum = jnp.sum(jnp.where(is_gt, 1.0, 0.0), axis=1, keepdims=True)
            ce_col = jnp.where(cls_col == 0, ce, 0.0)                    # (C, 1)

            slab = jnp.concatenate([inter, psum, gsum, ce_col], axis=1)  # (C, 4)
            acc_ref[s, :, :] = acc_ref[s, :, :] + slab

        accumulate(0, ed_ref[0], gt_all[0:1, :])
        accumulate(1, es_ref[0], gt_all[1:2, :])

        # Finalize: pack the accumulated stats into the lane-dense output row,
        # once per (sample, split) instead of once per chunk.
        @pl.when(k == num_k - 1)
        def _():
            acc = acc_ref[...]                                           # (2, C, 4)
            lane_c = jax.lax.broadcasted_iota(jnp.int32, (C, _STATS_W), 1)
            cls_c = jax.lax.broadcasted_iota(jnp.int32, (C, _STATS_W), 0)
            lane1 = jax.lax.broadcasted_iota(jnp.int32, (1, _STATS_W), 1)

            def pack(sl):
                # sl: (C, 4) -> (1, _STATS_W):
                #   lane 0 = CE sum, 1..C = inter, C+1..2C = pred-count, 2C+1..3C = gt-count
                inter = sl[:, 0:1]
                psum = sl[:, 1:2]
                gsum = sl[:, 2:3]
                ce = sl[0:1, 3:4]
                contrib = (jnp.where(lane_c == cls_c + 1, inter, 0.0)
                           + jnp.where(lane_c == cls_c + 1 + C, psum, 0.0)
                           + jnp.where(lane_c == cls_c + 1 + 2 * C, gsum, 0.0))
                return (jnp.sum(contrib, axis=0, keepdims=True)
                        + jnp.where(lane1 == 0, ce, 0.0))

            row_ed = pack(acc[0])
            row_es = pack(acc[1])
            sub = jax.lax.broadcasted_iota(jnp.int32, (2, _STATS_W), 0)
            out_ref[...] = jnp.where(sub == 0, row_ed, row_es).reshape(1, 2, _STATS_W)

    return kernel


def ce_dice_loss(ED_seg, ES_seg, gt, max_chunk=None):
    """Matches CE_Dice_loss.forward: ((CE_ED+CE_ES)/2, (Dice_ED+Dice_ES)/2)."""
    N, C, H, W = ED_seg.shape
    P = H * W
    assert ES_seg.shape == (N, C, H, W)
    assert 3 * C + 1 <= _STATS_W

    ed = ED_seg.reshape(N, C, P)                      # contiguous, free
    es = ES_seg.reshape(N, C, P)
    labels = gt.reshape(N, 2, P)
    if not jnp.issubdtype(labels.dtype, jnp.integer):
        labels = labels.astype(jnp.int32)             # only if upstream gave floats

    logit_bytes = jnp.dtype(ED_seg.dtype).itemsize
    label_bytes = jnp.dtype(labels.dtype).itemsize
    bytes_per_pixel_db = 2 * (2 * C * logit_bytes + 2 * label_bytes)  # double-buffered

    Pt = _choose_chunk(P, bytes_per_pixel_db)
    if max_chunk is not None:                         # test hook / manual override
        Pt = min(Pt, max(128, (max_chunk // 128) * 128))
    Pp = _round_up(P, Pt)
    Ktot = Pp // Pt

    # When N == 1, split the pixel range across a second "parallel" grid axis
    # so both of v7x's TensorCores get work (no effect on single-TC chips).
    n_splits = 1
    if N == 1:
        if Ktot == 1 and Pp >= 2 * 128:
            Pt = _round_up(Pp // 2, 128)
            Pp = 2 * Pt
            Ktot = 2
        if Ktot % 2 == 0:
            n_splits = 2
    K = Ktot // n_splits

    padded = Pp != P
    if padded:
        pad = Pp - P
        ed = jnp.pad(ed, ((0, 0), (0, 0), (0, pad)))
        es = jnp.pad(es, ((0, 0), (0, 0), (0, pad)))
        labels = jnp.pad(labels, ((0, 0), (0, 0), (0, pad)))

    kernel = _build_kernel(C, Pt, P, padded)

    stats = pl.pallas_call(
        kernel,
        out_shape=jax.ShapeDtypeStruct((N * n_splits, 2, _STATS_W), jnp.float32),
        grid_spec=pltpu.PrefetchScalarGridSpec(
            num_scalar_prefetch=0,
            grid=(N, n_splits, K),
            in_specs=[
                pl.BlockSpec((1, C, Pt), lambda n, s, k: (n, 0, s * K + k)),
                pl.BlockSpec((1, C, Pt), lambda n, s, k: (n, 0, s * K + k)),
                pl.BlockSpec((1, 2, Pt), lambda n, s, k: (n, 0, s * K + k)),
            ],
            out_specs=pl.BlockSpec((1, 2, _STATS_W),
                                   lambda n, s, k: (n * n_splits + s, 0, 0)),
            scratch_shapes=[pltpu.VMEM((2, C, 4), jnp.float32)],
        ),
        compiler_params=pltpu.CompilerParams(
            dimension_semantics=("parallel", "parallel", "arbitrary"),
        ),
        cost_estimate=pl.CostEstimate(
            flops=2 * N * Pp * (12 * C + 8),
            transcendentals=2 * N * Pp * (C + 1),
            bytes_accessed=2 * N * C * Pp * logit_bytes
                           + N * 2 * Pp * label_bytes
                           + N * n_splits * 2 * _STATS_W * 4,
        ),
    )(ed, es, labels)

    stats = stats.reshape(N, n_splits, 2, _STATS_W).sum(axis=1)   # (N, 2, W)
    ce_sum = stats[:, :, 0]                                       # (N, 2)
    inter = stats[:, :, 1:C + 1]                                  # (N, 2, C)
    psum = stats[:, :, C + 1:2 * C + 1]
    gsum = stats[:, :, 2 * C + 1:3 * C + 1]

    # (CE_ED + CE_ES)/2 == total per-pixel CE sum / (2*N*H*W)   (true P, not padded)
    ce_loss = jnp.sum(ce_sum) / (2 * N * P)

    smooth = 1e-6
    dice = 2.0 * (inter + smooth) / (psum + gsum + smooth)        # (N, 2, C)
    dice_loss_per_class = 1.0 - jnp.mean(dice, axis=0)            # (2, C)
    tot_dice_loss = jnp.mean(jnp.sum(dice_loss_per_class, axis=1))  # (ED+ES)/2
    return ce_loss, tot_dice_loss


def _reference(ED_seg, ES_seg, gt):
    """Pure-JAX reference mirroring the PyTorch module."""
    smooth = 1e-6

    def ce(logits, labels):
        lse = jax.nn.logsumexp(logits, axis=1)                                # (N,H,W)
        at = jnp.take_along_axis(logits, labels[:, None], axis=1)[:, 0]       # (N,H,W)
        return jnp.mean(lse - at)

    def dice_loss(inp, tgt):
        N = inp.shape[0]
        i = inp.reshape(N, -1)
        t = tgt.reshape(N, -1)
        d = 2.0 * (jnp.sum(i * t, axis=1) + smooth) / (jnp.sum(i, axis=1) + jnp.sum(t, axis=1) + smooth)
        return 1.0 - jnp.sum(d) / N

    ce_total = (ce(ED_seg, gt[:, 0]) + ce(ES_seg, gt[:, 1])) / 2.0
    ed_pred = jnp.argmax(ED_seg, axis=1)
    es_pred = jnp.argmax(ES_seg, axis=1)
    tot_ed = 0.0
    tot_es = 0.0
    for i in range(4):
        tot_ed += dice_loss((ed_pred == i).astype(jnp.float32), (gt[:, 0] == i).astype(jnp.float32))
        tot_es += dice_loss((es_pred == i).astype(jnp.float32), (gt[:, 1] == i).astype(jnp.float32))
    return ce_total, (tot_ed + tot_es) / 2.0


if __name__ == "__main__":
    def run_case(N, H, W, max_chunk=None, seed=0):
        C = 4
        key = jax.random.PRNGKey(seed)
        k1, k2, k3 = jax.random.split(key, 3)
        ED_seg = jax.random.normal(k1, (N, C, H, W), dtype=jnp.float32)
        ES_seg = jax.random.normal(k2, (N, C, H, W), dtype=jnp.float32)
        gt = jax.random.randint(k3, (N, 2, H, W), 0, C, dtype=jnp.int32)

        fn = jax.jit(functools.partial(ce_dice_loss, max_chunk=max_chunk))
        ce_val, dice_val = fn(ED_seg, ES_seg, gt)
        jax.block_until_ready((ce_val, dice_val))

        ce_ref, dice_ref = _reference(ED_seg, ES_seg, gt)
        assert np.allclose(np.asarray(ce_val), np.asarray(ce_ref), rtol=1e-5, atol=1e-5), \
            ("CE mismatch", N, H, W, max_chunk, float(ce_val), float(ce_ref))
        assert np.allclose(np.asarray(dice_val), np.asarray(dice_ref), rtol=1e-5, atol=1e-5), \
            ("Dice mismatch", N, H, W, max_chunk, float(dice_val), float(dice_ref))

    run_case(N=2, H=16, W=16)                  # single full-P block per sample
    run_case(N=2, H=16, W=16, max_chunk=128)   # multi-chunk accumulation path (K > 1)
    run_case(N=1, H=16, W=16)                  # N==1: pixel axis split across 2 cores (v7x)
    run_case(N=2, H=10, W=10)                  # P not a multiple of 128: pad + mask path

    print("KERNEL_OK")
</pallas_src>

<mosaic_0001>
module attributes {stable_mosaic.version = 11 : i64} {
  func.func @kernel(%arg0: i32, %arg1: i32, %arg2: i32, %arg3: memref<1x4x256xf32, #tpu.memory_space<vmem>>, %arg4: memref<1x4x256xf32, #tpu.memory_space<vmem>>, %arg5: memref<1x2x256xi32, #tpu.memory_space<vmem>>, %arg6: memref<1x2x128xf32, #tpu.memory_space<vmem>>, %arg7: memref<2x4x4xf32, #tpu.memory_space<vmem>>) attributes {dimension_semantics = [#tpu.dimension_semantics<parallel>, #tpu.dimension_semantics<parallel>, #tpu.dimension_semantics<arbitrary>], iteration_bounds = array<i64: 2, 1, 1>, scalar_prefetch = 0 : i64, scratch_operands = 1 : i64, tpu.core_type = #tpu.core_type<tc>, window_params = [{transform_indices = @transform_0, window_bounds = array<i64: 1, 4, 256>}, {transform_indices = @transform_1, window_bounds = array<i64: 1, 4, 256>}, {transform_indices = @transform_2, window_bounds = array<i64: 1, 2, 256>}, {transform_indices = @transform_3, window_bounds = array<i64: 1, 2, 128>}]} {
    %c0_i32 = arith.constant 0 : i32
    %0 = arith.cmpi eq, %arg2, %c0_i32 : i32
    %1 = arith.extui %0 : i1 to i32
    %c0_i32_0 = arith.constant 0 : i32
    %2 = arith.cmpi ne, %1, %c0_i32_0 : i32
    scf.if %2 {
      %cst_56 = arith.constant 0.000000e+00 : f32
      %126 = vector.broadcast %cst_56 : f32 to vector<2x4x4xf32>
      %c0_57 = arith.constant 0 : index
      %c0_58 = arith.constant 0 : index
      %c0_59 = arith.constant 0 : index
      %127 = vector.load %arg7[%c0_57, %c0_58, %c0_59] : memref<2x4x4xf32, #tpu.memory_space<vmem>>, vector<2x4x4xf32>
      tpu.vector_store %arg7[%c0_57, %c0_58, %c0_59], %126 {strides = array<i32>} : memref<2x4x4xf32, #tpu.memory_space<vmem>>, vector<2x4x4xf32>,
    } else {
    }
    %3 = tpu.iota {dimensions = array<i32: 0>} : vector<4x256xi32>
    %4 = tpu.iota {dimensions = array<i32: 0>} : vector<4x1xi32>
    %c0 = arith.constant 0 : index
    %c0_1 = arith.constant 0 : index
    %c0_2 = arith.constant 0 : index
    %5 = vector.load %arg5[%c0, %c0_1, %c0_2] : memref<1x2x256xi32, #tpu.memory_space<vmem>>, vector<1x2x256xi32>
    %6 = vector.shape_cast %5 : vector<1x2x256xi32> to vector<2x256xi32>
    %c0_3 = arith.constant 0 : index
    %c0_4 = arith.constant 0 : index
    %c0_5 = arith.constant 0 : index
    %7 = vector.load %arg3[%c0_3, %c0_4, %c0_5] : memref<1x4x256xf32, #tpu.memory_space<vmem>>, vector<1x4x256xf32>
    %8 = vector.shape_cast %7 : vector<1x4x256xf32> to vector<4x256xf32>
    %9 = vector.extract_strided_slice %6 {offsets = [0, 0], sizes = [1, 256], strides = [1, 1]} : vector<2x256xi32> to vector<1x256xi32>
    %cst = arith.constant dense<0xFF800000> : vector<256xf32>
    %10 = vector.multi_reduction <maximumf>, %8, %cst [0] : vector<4x256xf32> to vector<256xf32>
    %11 = vector.shape_cast %10 : vector<256xf32> to vector<1x256xf32>
    %12 = vector.broadcast %11 : vector<1x256xf32> to vector<4x256xf32>
    %13 = arith.subf %8, %12 : vector<4x256xf32>
    %14 = math.exp %13 : vector<4x256xf32>
    %cst_6 = arith.constant dense<0.000000e+00> : vector<256xf32>
    %15 = vector.multi_reduction <add>, %14, %cst_6 [0] : vector<4x256xf32> to vector<256xf32>
    %16 = vector.shape_cast %15 : vector<256xf32> to vector<1x256xf32>
    %17 = math.log %16 : vector<1x256xf32>
    %18 = arith.addf %11, %17 : vector<1x256xf32>
    %19 = vector.broadcast %9 : vector<1x256xi32> to vector<4x256xi32>
    %20 = arith.cmpi eq, %3, %19 : vector<4x256xi32>
    %cst_7 = arith.constant 0.000000e+00 : f32
    %21 = vector.broadcast %cst_7 : f32 to vector<4x256xf32>
    %22 = arith.select %20, %8, %21 : vector<4x256xi1>, vector<4x256xf32>
    %cst_8 = arith.constant dense<0.000000e+00> : vector<256xf32>
    %23 = vector.multi_reduction <add>, %22, %cst_8 [0] : vector<4x256xf32> to vector<256xf32>
    %24 = vector.shape_cast %23 : vector<256xf32> to vector<1x256xf32>
    %25 = arith.subf %18, %24 : vector<1x256xf32>
    %26 = vector.broadcast %11 : vector<1x256xf32> to vector<4x256xf32>
    %27 = arith.cmpf oeq, %8, %26 : vector<4x256xf32>
    %c4_i32 = arith.constant 4 : i32
    %28 = vector.broadcast %c4_i32 : i32 to vector<4x256xi32>
    %29 = arith.select %27, %3, %28 : vector<4x256xi1>, vector<4x256xi32>
    %cst_9 = arith.constant dense<2147483647> : vector<256xi32>
    %30 = vector.multi_reduction <minsi>, %29, %cst_9 [0] : vector<4x256xi32> to vector<256xi32>
    %31 = vector.shape_cast %30 : vector<256xi32> to vector<1x256xi32>
    %32 = vector.broadcast %31 : vector<1x256xi32> to vector<4x256xi32>
    %33 = arith.cmpi eq, %3, %32 : vector<4x256xi32>
    %cst_10 = arith.constant dense<0.000000e+00> : vector<1xf32>
    %34 = vector.multi_reduction <add>, %25, %cst_10 [1] : vector<1x256xf32> to vector<1xf32>
    %35 = vector.shape_cast %34 : vector<1xf32> to vector<1x1xf32>
    %36 = arith.andi %33, %20 : vector<4x256xi1>
    %cst_11 = arith.constant 1.000000e+00 : f32
    %cst_12 = arith.constant 0.000000e+00 : f32
    %37 = vector.broadcast %cst_11 : f32 to vector<4x256xf32>
    %38 = vector.broadcast %cst_12 : f32 to vector<4x256xf32>
    %39 = arith.select %36, %37, %38 : vector<4x256xi1>, vector<4x256xf32>
    %cst_13 = arith.constant dense<0.000000e+00> : vector<4xf32>
    %40 = vector.multi_reduction <add>, %39, %cst_13 [1] : vector<4x256xf32> to vector<4xf32>
    %41 = vector.shape_cast %40 : vector<4xf32> to vector<4x1xf32>
    %cst_14 = arith.constant 1.000000e+00 : f32
    %cst_15 = arith.constant 0.000000e+00 : f32
    %42 = vector.broadcast %cst_14 : f32 to vector<4x256xf32>
    %43 = vector.broadcast %cst_15 : f32 to vector<4x256xf32>
    %44 = arith.select %33, %42, %43 : vector<4x256xi1>, vector<4x256xf32>
    %cst_16 = arith.constant dense<0.000000e+00> : vector<4xf32>
    %45 = vector.multi_reduction <add>, %44, %cst_16 [1] : vector<4x256xf32> to vector<4xf32>
    %46 = vector.shape_cast %45 : vector<4xf32> to vector<4x1xf32>
    %cst_17 = arith.constant 1.000000e+00 : f32
    %cst_18 = arith.constant 0.000000e+00 : f32
    %47 = vector.broadcast %cst_17 : f32 to vector<4x256xf32>
    %48 = vector.broadcast %cst_18 : f32 to vector<4x256xf32>
    %49 = arith.select %20, %47, %48 : vector<4x256xi1>, vector<4x256xf32>
    %cst_19 = arith.constant dense<0.000000e+00> : vector<4xf32>
    %50 = vector.multi_reduction <add>, %49, %cst_19 [1] : vector<4x256xf32> to vector<4xf32>
    %51 = vector.shape_cast %50 : vector<4xf32> to vector<4x1xf32>
    %c0_i32_20 = arith.constant 0 : i32
    %52 = vector.broadcast %c0_i32_20 : i32 to vector<4x1xi32>
    %53 = arith.cmpi eq, %4, %52 : vector<4x1xi32>
    %cst_21 = arith.constant 0.000000e+00 : f32
    %54 = vector.shape_cast %35 : vector<1x1xf32> to vector<1x1xf32>
    %55 = vector.broadcast %54 : vector<1x1xf32> to vector<4x1xf32>
    %56 = vector.broadcast %cst_21 : f32 to vector<4x1xf32>
    %57 = arith.select %53, %55, %56 : vector<4x1xi1>, vector<4x1xf32>
    %58 = tpu.concatenate %41, %46, %51, %57 in 1 : vector<4x1xf32>, vector<4x1xf32>, vector<4x1xf32>, vector<4x1xf32> -> vector<4x4xf32>
    %c0_22 = arith.constant 0 : index
    %c0_23 = arith.constant 0 : index
    %c0_24 = arith.constant 0 : index
    %59 = vector.load %arg7[%c0_22, %c0_23, %c0_24] : memref<2x4x4xf32, #tpu.memory_space<vmem>>, vector<1x4x4xf32>
    %60 = vector.shape_cast %59 : vector<1x4x4xf32> to vector<4x4xf32>
    %61 = arith.addf %60, %58 : vector<4x4xf32>
    %c0_25 = arith.constant 0 : index
    %c0_26 = arith.constant 0 : index
    %c0_27 = arith.constant 0 : index
    %62 = vector.load %arg7[%c0_25, %c0_26, %c0_27] : memref<2x4x4xf32, #tpu.memory_space<vmem>>, vector<1x4x4xf32>
    %63 = vector.shape_cast %62 : vector<1x4x4xf32> to vector<4x4xf32>
    %64 = vector.shape_cast %61 : vector<4x4xf32> to vector<1x4x4xf32>
    tpu.vector_store %arg7[%c0_25, %c0_26, %c0_27], %64 {strides = array<i32>} : memref<2x4x4xf32, #tpu.memory_space<vmem>>, vector<1x4x4xf32>,
    %c0_28 = arith.constant 0 : index
    %c0_29 = arith.constant 0 : index
    %c0_30 = arith.constant 0 : index
    %65 = vector.load %arg4[%c0_28, %c0_29, %c0_30] : memref<1x4x256xf32, #tpu.memory_space<vmem>>, vector<1x4x256xf32>
    %66 = vector.shape_cast %65 : vector<1x4x256xf32> to vector<4x256xf32>
    %67 = vector.extract_strided_slice %6 {offsets = [1, 0], sizes = [1, 256], strides = [1, 1]} : vector<2x256xi32> to vector<1x256xi32>
    %cst_31 = arith.constant dense<0xFF800000> : vector<256xf32>
    %68 = vector.multi_reduction <maximumf>, %66, %cst_31 [0] : vector<4x256xf32> to vector<256xf32>
    %69 = vector.shape_cast %68 : vector<256xf32> to vector<1x256xf32>
    %70 = vector.broadcast %69 : vector<1x256xf32> to vector<4x256xf32>
    %71 = arith.subf %66, %70 : vector<4x256xf32>
    %72 = math.exp %71 : vector<4x256xf32>
    %cst_32 = arith.constant dense<0.000000e+00> : vector<256xf32>
    %73 = vector.multi_reduction <add>, %72, %cst_32 [0] : vector<4x256xf32> to vector<256xf32>
    %74 = vector.shape_cast %73 : vector<256xf32> to vector<1x256xf32>
    %75 = math.log %74 : vector<1x256xf32>
    %76 = arith.addf %69, %75 : vector<1x256xf32>
    %77 = vector.broadcast %67 : vector<1x256xi32> to vector<4x256xi32>
    %78 = arith.cmpi eq, %3, %77 : vector<4x256xi32>
    %cst_33 = arith.constant 0.000000e+00 : f32
    %79 = vector.broadcast %cst_33 : f32 to vector<4x256xf32>
    %80 = arith.select %78, %66, %79 : vector<4x256xi1>, vector<4x256xf32>
    %cst_34 = arith.constant dense<0.000000e+00> : vector<256xf32>
    %81 = vector.multi_reduction <add>, %80, %cst_34 [0] : vector<4x256xf32> to vector<256xf32>
    %82 = vector.shape_cast %81 : vector<256xf32> to vector<1x256xf32>
    %83 = arith.subf %76, %82 : vector<1x256xf32>
    %84 = vector.broadcast %69 : vector<1x256xf32> to vector<4x256xf32>
    %85 = arith.cmpf oeq, %66, %84 : vector<4x256xf32>
    %c4_i32_35 = arith.constant 4 : i32
    %86 = vector.broadcast %c4_i32_35 : i32 to vector<4x256xi32>
    %87 = arith.select %85, %3, %86 : vector<4x256xi1>, vector<4x256xi32>
    %cst_36 = arith.constant dense<2147483647> : vector<256xi32>
    %88 = vector.multi_reduction <minsi>, %87, %cst_36 [0] : vector<4x256xi32> to vector<256xi32>
    %89 = vector.shape_cast %88 : vector<256xi32> to vector<1x256xi32>
    %90 = vector.broadcast %89 : vector<1x256xi32> to vector<4x256xi32>
    %91 = arith.cmpi eq, %3, %90 : vector<4x256xi32>
    %cst_37 = arith.constant dense<0.000000e+00> : vector<1xf32>
    %92 = vector.multi_reduction <add>, %83, %cst_37 [1] : vector<1x256xf32> to vector<1xf32>
    %93 = vector.shape_cast %92 : vector<1xf32> to vector<1x1xf32>
    %94 = arith.andi %91, %78 : vector<4x256xi1>
    %cst_38 = arith.constant 1.000000e+00 : f32
    %cst_39 = arith.constant 0.000000e+00 : f32
    %95 = vector.broadcast %cst_38 : f32 to vector<4x256xf32>
    %96 = vector.broadcast %cst_39 : f32 to vector<4x256xf32>
    %97 = arith.select %94, %95, %96 : vector<4x256xi1>, vector<4x256xf32>
    %cst_40 = arith.constant dense<0.000000e+00> : vector<4xf32>
    %98 = vector.multi_reduction <add>, %97, %cst_40 [1] : vector<4x256xf32> to vector<4xf32>
    %99 = vector.shape_cast %98 : vector<4xf32> to vector<4x1xf32>
    %cst_41 = arith.constant 1.000000e+00 : f32
    %cst_42 = arith.constant 0.000000e+00 : f32
    %100 = vector.broadcast %cst_41 : f32 to vector<4x256xf32>
    %101 = vector.broadcast %cst_42 : f32 to vector<4x256xf32>
    %102 = arith.select %91, %100, %101 : vector<4x256xi1>, vector<4x256xf32>
    %cst_43 = arith.constant dense<0.000000e+00> : vector<4xf32>
    %103 = vector.multi_reduction <add>, %102, %cst_43 [1] : vector<4x256xf32> to vector<4xf32>
    %104 = vector.shape_cast %103 : vector<4xf32> to vector<4x1xf32>
    %cst_44 = arith.constant 1.000000e+00 : f32
    %cst_45 = arith.constant 0.000000e+00 : f32
    %105 = vector.broadcast %cst_44 : f32 to vector<4x256xf32>
    %106 = vector.broadcast %cst_45 : f32 to vector<4x256xf32>
    %107 = arith.select %78, %105, %106 : vector<4x256xi1>, vector<4x256xf32>
    %cst_46 = arith.constant dense<0.000000e+00> : vector<4xf32>
    %108 = vector.multi_reduction <add>, %107, %cst_46 [1] : vector<4x256xf32> to vector<4xf32>
    %109 = vector.shape_cast %108 : vector<4xf32> to vector<4x1xf32>
    %c0_i32_47 = arith.constant 0 : i32
    %110 = vector.broadcast %c0_i32_47 : i32 to vector<4x1xi32>
    %111 = arith.cmpi eq, %4, %110 : vector<4x1xi32>
    %cst_48 = arith.constant 0.000000e+00 : f32
    %112 = vector.shape_cast %93 : vector<1x1xf32> to vector<1x1xf32>
    %113 = vector.broadcast %112 : vector<1x1xf32> to vector<4x1xf32>
    %114 = vector.broadcast %cst_48 : f32 to vector<4x1xf32>
    %115 = arith.select %111, %113, %114 : vector<4x1xi1>, vector<4x1xf32>
    %116 = tpu.concatenate %99, %104, %109, %115 in 1 : vector<4x1xf32>, vector<4x1xf32>, vector<4x1xf32>, vector<4x1xf32> -> vector<4x4xf32>
    %c1 = arith.constant 1 : index
    %c0_49 = arith.constant 0 : index
    %c0_50 = arith.constant 0 : index
    %117 = vector.load %arg7[%c1, %c0_49, %c0_50] : memref<2x4x4xf32, #tpu.memory_space<vmem>>, vector<1x4x4xf32>
    %118 = vector.shape_cast %117 : vector<1x4x4xf32> to vector<4x4xf32>
    %119 = arith.addf %118, %116 : vector<4x4xf32>
    %c1_51 = arith.constant 1 : index
    %c0_52 = arith.constant 0 : index
    %c0_53 = arith.constant 0 : index
    %120 = vector.load %arg7[%c1_51, %c0_52, %c0_53] : memref<2x4x4xf32, #tpu.memory_space<vmem>>, vector<1x4x4xf32>
    %121 = vector.shape_cast %120 : vector<1x4x4xf32> to vector<4x4xf32>
    %122 = vector.shape_cast %119 : vector<4x4xf32> to vector<1x4x4xf32>
    tpu.vector_store %arg7[%c1_51, %c0_52, %c0_53], %122 {strides = array<i32>} : memref<2x4x4xf32, #tpu.memory_space<vmem>>, vector<1x4x4xf32>,
    %c0_i32_54 = arith.constant 0 : i32
    %123 = arith.cmpi eq, %arg2, %c0_i32_54 : i32
    %124 = arith.extui %123 : i1 to i32
    %c0_i32_55 = arith.constant 0 : i32
    %125 = arith.cmpi ne, %124, %c0_i32_55 : i32
    scf.if %125 {
      %c0_56 = arith.constant 0 : index
      %c0_57 = arith.constant 0 : index
      %c0_58 = arith.constant 0 : index
      %126 = vector.load %arg7[%c0_56, %c0_57, %c0_58] : memref<2x4x4xf32, #tpu.memory_space<vmem>>, vector<2x4x4xf32>
      %127 = tpu.iota {dimensions = array<i32: 1>} : vector<4x128xi32>
      %128 = tpu.iota {dimensions = array<i32: 0>} : vector<4x128xi32>
      %129 = tpu.iota {dimensions = array<i32: 1>} : vector<1x128xi32>
      %130 = vector.extract_strided_slice %126 {offsets = [0, 0, 0], sizes = [1, 4, 4], strides = [1, 1, 1]} : vector<2x4x4xf32> to vector<1x4x4xf32>
      %131 = vector.shape_cast %130 : vector<1x4x4xf32> to vector<4x4xf32>
      %132 = vector.extract_strided_slice %131 {offsets = [0, 0], sizes = [4, 1], strides = [1, 1]} : vector<4x4xf32> to vector<4x1xf32>
      %133 = vector.extract_strided_slice %131 {offsets = [0, 1], sizes = [4, 1], strides = [1, 1]} : vector<4x4xf32> to vector<4x1xf32>
      %134 = vector.extract_strided_slice %131 {offsets = [0, 2], sizes = [4, 1], strides = [1, 1]} : vector<4x4xf32> to vector<4x1xf32>
      %135 = vector.extract_strided_slice %131 {offsets = [0, 3], sizes = [1, 1], strides = [1, 1]} : vector<4x4xf32> to vector<1x1xf32>
      %c1_i32 = arith.constant 1 : i32
      %136 = vector.broadcast %c1_i32 : i32 to vector<4x128xi32>
      %137 = arith.addi %128, %136 : vector<4x128xi32>
      %138 = arith.cmpi eq, %127, %137 : vector<4x128xi32>
      %cst_59 = arith.constant 0.000000e+00 : f32
      %139 = vector.shape_cast %132 : vector<4x1xf32> to vector<4x1xf32>
      %140 = vector.broadcast %139 : vector<4x1xf32> to vector<4x128xf32>
      %141 = vector.broadcast %cst_59 : f32 to vector<4x128xf32>
      %142 = arith.select %138, %140, %141 : vector<4x128xi1>, vector<4x128xf32>
      %c1_i32_60 = arith.constant 1 : i32
      %143 = vector.broadcast %c1_i32_60 : i32 to vector<4x128xi32>
      %144 = arith.addi %128, %143 : vector<4x128xi32>
      %c4_i32_61 = arith.constant 4 : i32
      %145 = vector.broadcast %c4_i32_61 : i32 to vector<4x128xi32>
      %146 = arith.addi %144, %145 : vector<4x128xi32>
      %147 = arith.cmpi eq, %127, %146 : vector<4x128xi32>
      %cst_62 = arith.constant 0.000000e+00 : f32
      %148 = vector.shape_cast %133 : vector<4x1xf32> to vector<4x1xf32>
      %149 = vector.broadcast %148 : vector<4x1xf32> to vector<4x128xf32>
      %150 = vector.broadcast %cst_62 : f32 to vector<4x128xf32>
      %151 = arith.select %147, %149, %150 : vector<4x128xi1>, vector<4x128xf32>
      %152 = arith.addf %142, %151 : vector<4x128xf32>
      %c1_i32_63 = arith.constant 1 : i32
      %153 = vector.broadcast %c1_i32_63 : i32 to vector<4x128xi32>
      %154 = arith.addi %128, %153 : vector<4x128xi32>
      %c8_i32 = arith.constant 8 : i32
      %155 = vector.broadcast %c8_i32 : i32 to vector<4x128xi32>
      %156 = arith.addi %154, %155 : vector<4x128xi32>
      %157 = arith.cmpi eq, %127, %156 : vector<4x128xi32>
      %cst_64 = arith.constant 0.000000e+00 : f32
      %158 = vector.shape_cast %134 : vector<4x1xf32> to vector<4x1xf32>
      %159 = vector.broadcast %158 : vector<4x1xf32> to vector<4x128xf32>
      %160 = vector.broadcast %cst_64 : f32 to vector<4x128xf32>
      %161 = arith.select %157, %159, %160 : vector<4x128xi1>, vector<4x128xf32>
      %162 = arith.addf %152, %161 : vector<4x128xf32>
      %cst_65 = arith.constant dense<0.000000e+00> : vector<128xf32>
      %163 = vector.multi_reduction <add>, %162, %cst_65 [0] : vector<4x128xf32> to vector<128xf32>
      %164 = vector.shape_cast %163 : vector<128xf32> to vector<1x128xf32>
      %c0_i32_66 = arith.constant 0 : i32
      %165 = vector.broadcast %c0_i32_66 : i32 to vector<1x128xi32>
      %166 = arith.cmpi eq, %129, %165 : vector<1x128xi32>
      %cst_67 = arith.constant 0.000000e+00 : f32
      %167 = vector.shape_cast %135 : vector<1x1xf32> to vector<1x1xf32>
      %168 = vector.broadcast %167 : vector<1x1xf32> to vector<1x128xf32>
      %169 = vector.broadcast %cst_67 : f32 to vector<1x128xf32>
      %170 = arith.select %166, %168, %169 : vector<1x128xi1>, vector<1x128xf32>
      %171 = arith.addf %164, %170 : vector<1x128xf32>
      %172 = vector.extract_strided_slice %126 {offsets = [1, 0, 0], sizes = [1, 4, 4], strides = [1, 1, 1]} : vector<2x4x4xf32> to vector<1x4x4xf32>
      %173 = vector.shape_cast %172 : vector<1x4x4xf32> to vector<4x4xf32>
      %174 = vector.extract_strided_slice %173 {offsets = [0, 0], sizes = [4, 1], strides = [1, 1]} : vector<4x4xf32> to vector<4x1xf32>
      %175 = vector.extract_strided_slice %173 {offsets = [0, 1], sizes = [4, 1], strides = [1, 1]} : vector<4x4xf32> to vector<4x1xf32>
      %176 = vector.extract_strided_slice %173 {offsets = [0, 2], sizes = [4, 1], strides = [1, 1]} : vector<4x4xf32> to vector<4x1xf32>
      %177 = vector.extract_strided_slice %173 {offsets = [0, 3], sizes = [1, 1], strides = [1, 1]} : vector<4x4xf32> to vector<1x1xf32>
      %c1_i32_68 = arith.constant 1 : i32
      %178 = vector.broadcast %c1_i32_68 : i32 to vector<4x128xi32>
      %179 = arith.addi %128, %178 : vector<4x128xi32>
      %180 = arith.cmpi eq, %127, %179 : vector<4x128xi32>
      %cst_69 = arith.constant 0.000000e+00 : f32
      %181 = vector.shape_cast %174 : vector<4x1xf32> to vector<4x1xf32>
      %182 = vector.broadcast %181 : vector<4x1xf32> to vector<4x128xf32>
      %183 = vector.broadcast %cst_69 : f32 to vector<4x128xf32>
      %184 = arith.select %180, %182, %183 : vector<4x128xi1>, vector<4x128xf32>
      %c1_i32_70 = arith.constant 1 : i32
      %185 = vector.broadcast %c1_i32_70 : i32 to vector<4x128xi32>
      %186 = arith.addi %128, %185 : vector<4x128xi32>
      %c4_i32_71 = arith.constant 4 : i32
      %187 = vector.broadcast %c4_i32_71 : i32 to vector<4x128xi32>
      %188 = arith.addi %186, %187 : vector<4x128xi32>
      %189 = arith.cmpi eq, %127, %188 : vector<4x128xi32>
      %cst_72 = arith.constant 0.000000e+00 : f32
      %190 = vector.shape_cast %175 : vector<4x1xf32> to vector<4x1xf32>
      %191 = vector.broadcast %190 : vector<4x1xf32> to vector<4x128xf32>
      %192 = vector.broadcast %cst_72 : f32 to vector<4x128xf32>
      %193 = arith.select %189, %191, %192 : vector<4x128xi1>, vector<4x128xf32>
      %194 = arith.addf %184, %193 : vector<4x128xf32>
      %c1_i32_73 = arith.constant 1 : i32
      %195 = vector.broadcast %c1_i32_73 : i32 to vector<4x128xi32>
      %196 = arith.addi %128, %195 : vector<4x128xi32>
      %c8_i32_74 = arith.constant 8 : i32
      %197 = vector.broadcast %c8_i32_74 : i32 to vector<4x128xi32>
      %198 = arith.addi %196, %197 : vector<4x128xi32>
      %199 = arith.cmpi eq, %127, %198 : vector<4x128xi32>
      %cst_75 = arith.constant 0.000000e+00 : f32
      %200 = vector.shape_cast %176 : vector<4x1xf32> to vector<4x1xf32>
      %201 = vector.broadcast %200 : vector<4x1xf32> to vector<4x128xf32>
      %202 = vector.broadcast %cst_75 : f32 to vector<4x128xf32>
      %203 = arith.select %199, %201, %202 : vector<4x128xi1>, vector<4x128xf32>
      %204 = arith.addf %194, %203 : vector<4x128xf32>
      %cst_76 = arith.constant dense<0.000000e+00> : vector<128xf32>
      %205 = vector.multi_reduction <add>, %204, %cst_76 [0] : vector<4x128xf32> to vector<128xf32>
      %206 = vector.shape_cast %205 : vector<128xf32> to vector<1x128xf32>
      %c0_i32_77 = arith.constant 0 : i32
      %207 = vector.broadcast %c0_i32_77 : i32 to vector<1x128xi32>
      %208 = arith.cmpi eq, %129, %207 : vector<1x128xi32>
      %cst_78 = arith.constant 0.000000e+00 : f32
      %209 = vector.shape_cast %177 : vector<1x1xf32> to vector<1x1xf32>
      %210 = vector.broadcast %209 : vector<1x1xf32> to vector<1x128xf32>
      %211 = vector.broadcast %cst_78 : f32 to vector<1x128xf32>
      %212 = arith.select %208, %210, %211 : vector<1x128xi1>, vector<1x128xf32>
      %213 = arith.addf %206, %212 : vector<1x128xf32>
      %214 = tpu.iota {dimensions = array<i32: 0>} : vector<2x128xi32>
      %c0_i32_79 = arith.constant 0 : i32
      %215 = vector.broadcast %c0_i32_79 : i32 to vector<2x128xi32>
      %216 = arith.cmpi eq, %214, %215 : vector<2x128xi32>
      %217 = vector.shape_cast %171 : vector<1x128xf32> to vector<1x128xf32>
      %218 = vector.broadcast %217 : vector<1x128xf32> to vector<2x128xf32>
      %219 = vector.shape_cast %213 : vector<1x128xf32> to vector<1x128xf32>
      %220 = vector.broadcast %219 : vector<1x128xf32> to vector<2x128xf32>
      %221 = arith.select %216, %218, %220 : vector<2x128xi1>, vector<2x128xf32>
      %222 = vector.shape_cast %221 : vector<2x128xf32> to vector<1x2x128xf32>
      %c0_80 = arith.constant 0 : index
      %c0_81 = arith.constant 0 : index
      %c0_82 = arith.constant 0 : index
      %223 = vector.load %arg6[%c0_80, %c0_81, %c0_82] : memref<1x2x128xf32, #tpu.memory_space<vmem>>, vector<1x2x128xf32>
      tpu.vector_store %arg6[%c0_80, %c0_81, %c0_82], %222 {strides = array<i32>} : memref<1x2x128xf32, #tpu.memory_space<vmem>>, vector<1x2x128xf32>,
    } else {
    }
    return
  }
  func.func @transform_0(%arg0: i32, %arg1: i32, %arg2: i32) -> (i32, i32, i32) {
    %c1_i32 = arith.constant 1 : i32
    %0 = arith.muli %arg1, %c1_i32 : i32
    %1 = arith.addi %0, %arg2 : i32
    %c0_i32 = arith.constant 0 : i32
    %c0_i32_0 = arith.constant 0 : i32
    return %arg0, %c0_i32, %1 : i32, i32, i32
  }
  func.func @transform_1(%arg0: i32, %arg1: i32, %arg2: i32) -> (i32, i32, i32) {
    %c1_i32 = arith.constant 1 : i32
    %0 = arith.muli %arg1, %c1_i32 : i32
    %1 = arith.addi %0, %arg2 : i32
    %c0_i32 = arith.constant 0 : i32
    %c0_i32_0 = arith.constant 0 : i32
    return %arg0, %c0_i32, %1 : i32, i32, i32
  }
  func.func @transform_2(%arg0: i32, %arg1: i32, %arg2: i32) -> (i32, i32, i32) {
    %c1_i32 = arith.constant 1 : i32
    %0 = arith.muli %arg1, %c1_i32 : i32
    %1 = arith.addi %0, %arg2 : i32
    %c0_i32 = arith.constant 0 : i32
    %c0_i32_0 = arith.constant 0 : i32
    return %arg0, %c0_i32, %1 : i32, i32, i32
  }
  func.func @transform_3(%arg0: i32, %arg1: i32, %arg2: i32) -> (i32, i32, i32) {
    %c1_i32 = arith.constant 1 : i32
    %0 = arith.muli %arg0, %c1_i32 : i32
    %1 = arith.addi %0, %arg1 : i32
    %c0_i32 = arith.constant 0 : i32
    %c0_i32_0 = arith.constant 0 : i32
    %c0_i32_1 = arith.constant 0 : i32
    return %1, %c0_i32, %c0_i32_0 : i32, i32, i32
  }
}

</mosaic_0001>

<llo_original>
// kernel: ce_dice_loss.1
$region0: #{ce_dice_loss.1}
  #allocation0 [shape = 'u32[]', space=smem, size = 0x4, offset = 0x4, fixed_abs, tag = 'smem constant byte address 0x4 - core index']
  #allocation1 [shape = 'u32[144,128]{1,0:T(1,128)}', space=vmem, size = 0x12000, scoped, tag = 'internal scratch']
  #allocation2 [shape = 'f32[2,4,4]{2,1,0:T(4,128)}', space=vmem, size = 0x1000, scoped, tag = 'scratch operand']
  %s0 = inlined_call_operand.vmem [shape: f32[2,4,256], index: 0, kind: input, shape index: {}]
  %s1 = inlined_call_operand.vmem [shape: f32[2,4,256], index: 1, kind: input, shape index: {}]
  %s2 = inlined_call_operand.vmem [shape: s32[2,2,256], index: 2, kind: input, shape index: {}]
  %s3 = inlined_call_operand.vmem [shape: f32[2,2,128], index: 3, kind: output, shape index: {}]
  %s4 = sld [smem:[#allocation0]]
  $region53: #{ce_dice_loss.1} parent=0
    _
  %s6 = ssub.s32 1, %s4
  %s7 = scalar_select 0, %s6, %s4
  loop: start=0, step=1, limit=4
  $region2: #{ce_dice_loss.1} parent=0 // loop_pre_header
    _
  $region3: #{ce_dice_loss.1} parent=0 // loop_header
    %s9 = sphi 0, %s13
    %p10 = scmp.ge.s32.totalorder %s9, 4
    %s16 = sphi 0, %s35
    %s17 = sphi 0, %s31
    %s18 = sphi 0, %s27
    %s19 = sphi 0, %s16
    %s20 = sphi 0, %s17
    %s21 = sphi 0, %s18
    %s22 = sphi 0, %s19
    %s23 = sphi 0, %s20
    %s24 = sphi 0, %s21
    %s42 = sphi 0, %s44
    %s45 = sphi 0, %s42
    %s46 = sphi 0, %s45
    %s62 = sphi 0, %s46
    %s72 = sphi 0, %s74
    %s75 = sphi 0, %s72
    %s76 = sphi 0, %s75
    %s92 = sphi 0, %s76
    %s102 = sphi 0, %s104
    %s105 = sphi 0, %s102
    %s106 = sphi 0, %s105
    %s122 = sphi 0, %s106
    %s130 = sphi 0, %s132
    %s133 = sphi 0, %s130
    %s134 = sphi 0, %s133
    %s150 = sphi 0, %s134
  $region4: #{ce_dice_loss.1} parent=0 // loop_header_branch
    %12 = sbr.rel (%p10) target = $region8
  $region5: #{ce_dice_loss.1} parent=0 // loop_body
    %s14 = ssub.s32 %s9, 1
    %s15 = ssub.s32 %s9, 2
    %s25 = sadd.s32 1, %s18
    %p26 = scmp.ge.s32.totalorder %s25, 1
    %s27 = scalar_select %p26, 0, %s25
    %s28 = sadd.s32 1, %s17
    %s29 = scalar_select %p26, %s28, %s17
    %p30 = scmp.ge.s32.totalorder %s29, 1
    %s31 = scalar_select %p30, 0, %s29
    %s32 = sadd.s32 1, %s16
    %s33 = scalar_select %p30, %s32, %s16
    %p34 = scmp.ge.s32.totalorder %s33, 2
    %s35 = scalar_select %p34, 0, %s33
    %s36 = sadd.s32 %s17, %s18
    %s37 = sadd.s32 %s31, %s27
    %s38 = ssub.s32 %s16, %s35
    %s39 = ssub.s32 %s36, %s37
    %s40 = sor.u32 %s38, %s39
    %p41 = scmp.eq.s32.totalorder %s40, 0
    %s43 = sadd.s32 %s42, 1
    %s44 = scalar_select %p41, %s42, %s43
    %p47 = pneg %p41
    %p48 = scmp.eq.s32.totalorder %s9, 1
    %p49 = por %p47, %p48
    %p50 = scmp.ne.s32.totalorder %s42, %s45
    %p51 = scmp.eq.s32.totalorder %s9, 0
    %p52 = por %p50, %p51
    %p53 = scmp.ne.s32.totalorder %s42, %s45
    %p54 = scmp.eq.s32.totalorder %s14, 1
    %p55 = por %p53, %p54
    %p56 = scmp.ne.s32.totalorder %s45, %s46
    %p57 = scmp.eq.s32.totalorder %s14, 0
    %p58 = por %p56, %p57
    %p59 = scmp.ne.s32.totalorder %s45, %s46
    %p60 = scmp.eq.s32.totalorder %s15, 1
    %p61 = por %p59, %p60
    %p63 = scmp.ne.s32.totalorder %s46, %s62
    %p64 = scmp.eq.s32.totalorder %s15, 0
    %p65 = por %p63, %p64
    %s66 = sadd.s32 %s17, %s18
    %s67 = sadd.s32 %s31, %s27
    %s68 = ssub.s32 %s16, %s35
    %s69 = ssub.s32 %s66, %s67
    %s70 = sor.u32 %s68, %s69
    %p71 = scmp.eq.s32.totalorder %s70, 0
    %s73 = sadd.s32 %s72, 1
    %s74 = scalar_select %p71, %s72, %s73
    %p77 = pneg %p71
    %p78 = scmp.eq.s32.totalorder %s9, 1
    %p79 = por %p77, %p78
    %p80 = scmp.ne.s32.totalorder %s72, %s75
    %p81 = scmp.eq.s32.totalorder %s9, 0
    %p82 = por %p80, %p81
    %p83 = scmp.ne.s32.totalorder %s72, %s75
    %p84 = scmp.eq.s32.totalorder %s14, 1
    %p85 = por %p83, %p84
    %p86 = scmp.ne.s32.totalorder %s75, %s76
    %p87 = scmp.eq.s32.totalorder %s14, 0
    %p88 = por %p86, %p87
    %p89 = scmp.ne.s32.totalorder %s75, %s76
    %p90 = scmp.eq.s32.totalorder %s15, 1
    %p91 = por %p89, %p90
    %p93 = scmp.ne.s32.totalorder %s76, %s92
    %p94 = scmp.eq.s32.totalorder %s15, 0
    %p95 = por %p93, %p94
    %s96 = sadd.s32 %s17, %s18
    %s97 = sadd.s32 %s31, %s27
    %s98 = ssub.s32 %s16, %s35
    %s99 = ssub.s32 %s96, %s97
    %s100 = sor.u32 %s98, %s99
    %p101 = scmp.eq.s32.totalorder %s100, 0
    %s103 = sadd.s32 %s102, 1
    %s104 = scalar_select %p101, %s102, %s103
    %p107 = pneg %p101
    %p108 = scmp.eq.s32.totalorder %s9, 1
    %p109 = por %p107, %p108
    %p110 = scmp.ne.s32.totalorder %s102, %s105
    %p111 = scmp.eq.s32.totalorder %s9, 0
    %p112 = por %p110, %p111
    %p113 = scmp.ne.s32.totalorder %s102, %s105
    %p114 = scmp.eq.s32.totalorder %s14, 1
    %p115 = por %p113, %p114
    %p116 = scmp.ne.s32.totalorder %s105, %s106
    %p117 = scmp.eq.s32.totalorder %s14, 0
    %p118 = por %p116, %p117
    %p119 = scmp.ne.s32.totalorder %s105, %s106
    %p120 = scmp.eq.s32.totalorder %s15, 1
    %p121 = por %p119, %p120
    %p123 = scmp.ne.s32.totalorder %s106, %s122
    %p124 = scmp.eq.s32.totalorder %s15, 0
    %p125 = por %p123, %p124
    %s126 = sadd.s32 %s16, %s17
    %s127 = sadd.s32 %s35, %s31
    %s128 = ssub.s32 %s126, %s127
    %p129 = scmp.eq.s32.totalorder %s128, 0
    %s131 = sadd.s32 %s130, 1
    %s132 = scalar_select %p129, %s130, %s131
    %p135 = pneg %p129
    %p136 = scmp.eq.s32.totalorder %s9, 1
    %p137 = por %p135, %p136
    %p138 = scmp.ne.s32.totalorder %s130, %s133
    %p139 = scmp.eq.s32.totalorder %s9, 0
    %p140 = por %p138, %p139
    %p141 = scmp.ne.s32.totalorder %s130, %s133
    %p142 = scmp.eq.s32.totalorder %s14, 1
    %p143 = por %p141, %p142
    %p144 = scmp.ne.s32.totalorder %s133, %s134
    %p145 = scmp.eq.s32.totalorder %s14, 0
    %p146 = por %p144, %p145
    %p147 = scmp.ne.s32.totalorder %s133, %s134
    %p148 = scmp.eq.s32.totalorder %s15, 1
    %p149 = por %p147, %p148
    %p151 = scmp.ne.s32.totalorder %s134, %s150
    %p152 = scmp.eq.s32.totalorder %s15, 0
    %p153 = por %p151, %p152
    %p154 = scmp.le.s32.totalorder 1, %s9
    %p155 = scmp.lt.s32.totalorder %s9, 3
    %p156 = pnand %p154, %p155
    %p157 = pneg %p156
    // Predicated region
    $region9: #{ce_dice_loss.1} parent=5 // pred_check
      _
    $region10: #{ce_dice_loss.1} parent=5 // pred_check_branch
      %159 = sbr.rel (%p156) target = $region12
    $region11: #{ce_dice_loss.1} parent=5 // pred_region
      %s160 = ssub.s32 %s9, 1
    $region12: #{ce_dice_loss.1} parent=5 // pred_fallthru
      _
    %p161 = scmp.lt.s32.totalorder %s9, 2
    // Predicated region
    $region13: #{ce_dice_loss.1} parent=5 // pred_check
      %p162 = pneg %p161
    $region14: #{ce_dice_loss.1} parent=5 // pred_check_branch
      %164 = sbr.rel (%p162) target = $region16
    $region15: #{ce_dice_loss.1} parent=5 // pred_region
      // Predicated region
      $region17: #{ce_dice_loss.1} parent=15 // pred_check
        %p165 = pneg %p52
      $region18: #{ce_dice_loss.1} parent=15 // pred_check_branch
        %167 = sbr.rel (%p165) target = $region20
      $region19: #{ce_dice_loss.1} parent=15 // pred_region
        %s168 = sadd.s32 %s17, %s18
        %s169 = smul.u32 2, %s168
        %p170 = scmp.lt.s32.totalorder %s16, 1
        %s171 = scalar_select %p170, %s16, 1
        %p172 = scmp.lt.s32.totalorder %s169, 1
        %s173 = scalar_select %p172, %s169, 1
        %s174 = smul.addr %s171, 2
        %s175 = sadd.s32 %s173, %s174
        %s176 = smul.addr %s175, 4
        %s177 = scalar_lea.vmem %s0, %s176
        %s178 = sadd.s32 %s17, %s18
        %s179 = smul.u32 2, %s178
      $region20: #{ce_dice_loss.1} parent=15 // pred_fallthru
        _
      // Predicated region
      $region21: #{ce_dice_loss.1} parent=15 // pred_check
        %p180 = pneg %p82
      $region22: #{ce_dice_loss.1} parent=15 // pred_check_branch
        %182 = sbr.rel (%p180) target = $region24
      $region23: #{ce_dice_loss.1} parent=15 // pred_region
        %s183 = sadd.s32 %s17, %s18
        %s184 = smul.u32 2, %s183
        %p185 = scmp.lt.s32.totalorder %s16, 1
        %s186 = scalar_select %p185, %s16, 1
        %p187 = scmp.lt.s32.totalorder %s184, 1
        %s188 = scalar_select %p187, %s184, 1
        %s189 = smul.addr %s186, 2
        %s190 = sadd.s32 %s188, %s189
        %s191 = smul.addr %s190, 4
        %s192 = scalar_lea.vmem %s1, %s191
        %s193 = sadd.s32 %s17, %s18
        %s194 = smul.u32 2, %s193
      $region24: #{ce_dice_loss.1} parent=15 // pred_fallthru
        _
      // Predicated region
      $region25: #{ce_dice_loss.1} parent=15 // pred_check
        %p195 = pneg %p112
      $region26: #{ce_dice_loss.1} parent=15 // pred_check_branch
        %197 = sbr.rel (%p195) target = $region28
      $region27: #{ce_dice_loss.1} parent=15 // pred_region
        %s198 = sadd.s32 %s17, %s18
        %s199 = smul.u32 2, %s198
        %p200 = scmp.lt.s32.totalorder %s16, 1
        %s201 = scalar_select %p200, %s16, 1
        %p202 = scmp.lt.s32.totalorder %s199, 1
        %s203 = scalar_select %p202, %s199, 1
        %s204 = smul.addr %s201, 2
        %s205 = sadd.s32 %s203, %s204
        %s206 = smul.addr %s205, 2
        %s207 = scalar_lea.vmem %s2, %s206
        %s208 = sadd.s32 %s17, %s18
        %s209 = smul.u32 2, %s208
      $region28: #{ce_dice_loss.1} parent=15 // pred_fallthru
        _
    $region16: #{ce_dice_loss.1} parent=5 // pred_fallthru
      _
    %p210 = scmp.le.s32.totalorder 1, %s9
    %p211 = scmp.lt.s32.totalorder %s9, 3
    %p212 = pnand %p210, %p211
    %p213 = pneg %p212
    // Predicated region
    $region29: #{ce_dice_loss.1} parent=5 // pred_check
      _
    $region30: #{ce_dice_loss.1} parent=5 // pred_check_branch
      %215 = sbr.rel (%p212) target = $region32
    $region31: #{ce_dice_loss.1} parent=5 // pred_region
      %s216 = ssub.s32 %s9, 1
      %s217 = sadd.s32 %s20, %s21
      %s218 = smul.u32 2, %s217
      %p219 = scmp.lt.s32.totalorder %s19, 1
      %s220 = scalar_select %p219, %s19, 1
      %p221 = scmp.lt.s32.totalorder %s218, 1
      %s222 = scalar_select %p221, %s218, 1
      %s223 = smul.addr %s220, 2
      %s224 = sadd.s32 %s222, %s223
      %s225 = smul.addr %s224, 4
      %s226 = scalar_lea.vmem %s0, %s225
      %p227 = pneg %p58
      %p228 = pneg %p55
      %s229 = sadd.s32 %s20, %s21
      %s230 = smul.u32 2, %s229
      %p231 = scmp.lt.s32.totalorder %s19, 1
      %s232 = scalar_select %p231, %s19, 1
      %p233 = scmp.lt.s32.totalorder %s230, 1
      %s234 = scalar_select %p233, %s230, 1
      %s235 = smul.addr %s232, 2
      %s236 = sadd.s32 %s234, %s235
      %s237 = smul.addr %s236, 4
      %s238 = scalar_lea.vmem %s1, %s237
      %p239 = pneg %p88
      %p240 = pneg %p85
      %s241 = sadd.s32 %s20, %s21
      %s242 = smul.u32 2, %s241
      %p243 = scmp.lt.s32.totalorder %s19, 1
      %s244 = scalar_select %p243, %s19, 1
      %p245 = scmp.lt.s32.totalorder %s242, 1
      %s246 = scalar_select %p245, %s242, 1
      %s247 = smul.addr %s244, 2
      %s248 = sadd.s32 %s246, %s247
      %s249 = smul.addr %s248, 2
      %s250 = scalar_lea.vmem %s2, %s249
      %p251 = pneg %p118
      %p252 = pneg %p115
      %p253 = pneg %p146
      %p254 = pneg %p143
      %s255 = sadd.s32 %s19, %s20
      %p256 = scmp.lt.s32.totalorder %s255, 1
      %s257 = scalar_select %p256, %s255, 1
      %s258 = smul.addr %s257, 2
      %s259 = scalar_lea.vmem %s3, %s258
      %s260 = sadd.s32 %s20, %s21
      %s261 = smul.u32 2, %s260
      %p262 = scmp.lt.s32.totalorder %s19, 1
      %s263 = scalar_select %p262, %s19, 1
      %p264 = scmp.lt.s32.totalorder %s261, 1
      %s265 = scalar_select %p264, %s261, 1
      %s266 = smul.addr %s263, 2
      %s267 = sadd.s32 %s265, %s266
      %s268 = smul.addr %s267, 4
      %s269 = scalar_lea.vmem %s0, %s268
      %s270 = sadd.s32 %s20, %s21
      %s271 = smul.u32 2, %s270
      %s272 = sadd.s32 %s20, %s21
      %s273 = smul.u32 2, %s272
      %p274 = scmp.lt.s32.totalorder %s19, 1
      %s275 = scalar_select %p274, %s19, 1
      %p276 = scmp.lt.s32.totalorder %s273, 1
      %s277 = scalar_select %p276, %s273, 1
      %s278 = smul.addr %s275, 2
      %s279 = sadd.s32 %s277, %s278
      %s280 = smul.addr %s279, 4
      %s281 = scalar_lea.vmem %s1, %s280
      %s282 = sadd.s32 %s20, %s21
      %s283 = smul.u32 2, %s282
      %s284 = sadd.s32 %s20, %s21
      %s285 = smul.u32 2, %s284
      %p286 = scmp.lt.s32.totalorder %s19, 1
      %s287 = scalar_select %p286, %s19, 1
      %p288 = scmp.lt.s32.totalorder %s285, 1
      %s289 = scalar_select %p288, %s285, 1
      %s290 = smul.addr %s287, 2
      %s291 = sadd.s32 %s289, %s290
      %s292 = smul.addr %s291, 2
      %s293 = scalar_lea.vmem %s2, %s292
      %s294 = sadd.s32 %s20, %s21
      %s295 = smul.u32 2, %s294
      %s296 = sadd.s32 %s19, %s20
      %p297 = scmp.lt.s32.totalorder %s296, 1
      %s298 = scalar_select %p297, %s296, 1
      %s299 = smul.addr %s298, 2
      %s300 = scalar_lea.vmem %s3, %s299
      %s301 = sadd.s32 %s19, %s20
      %p302 = scmp.eq.s32.totalorder %s21, 0
      // Predicated region
      $region33: #{ce_dice_loss.1} parent=31 // pred_check
        %p303 = pneg %p302
      $region34: #{ce_dice_loss.1} parent=31 // pred_check_branch
        %305 = sbr.rel (%p303) target = $region36
      $region35: #{ce_dice_loss.1} parent=31 // pred_region
        %vm306 = vcmask 27648
        %307 = vst.msk [vmem:[#allocation2] sm:$0xf] %vm306, 0.0
        %308 = vst.msk [vmem:[#allocation2 + $0x4] sm:$0xf] %vm306, 0.0
      $region36: #{ce_dice_loss.1} parent=31 // pred_fallthru
        _
      %v309 = vlaneseq
      %v310 = vshrl.u32 %v309, 7
      %v311 = vld [vmem:[%s293] sm:$0xf]
      %v312 = vld [vmem:[%s269] sm:$0xff]
      %v314 = vcombine.high %v312, %v312
      %vm316 = vcmask 1043456
      %v317 = vsel %vm316, %v312, -inf
      %v318 = vrot.slane %v317, 4
      %v319 = vmax.f32 %v317, %v318
      %v320 = vrot.slane %v319, 2
      %v321 = vmax.f32 %v319, %v320
      %v322 = vrot.slane %v321, 1
      %v323 = vmax.f32 %v321, %v322
      %v324 = vsel %vm316, %v314, -inf
      %v325 = vrot.slane %v324, 4
      %v326 = vmax.f32 %v324, %v325
      %v327 = vrot.slane %v326, 2
      %v328 = vmax.f32 %v326, %v327
      %v329 = vrot.slane %v328, 1
      %v330 = vmax.f32 %v328, %v329
      %v333 = vcombine.low %v323, %v330
      %v335 = vsub.f32 %v312, %v333
      %v336 = vmul.f32 %v335, 1.442695
      %v337 = vpow.pop %v336
      %v339 = vcombine.high %v337, %v337
      %v341 = vsel %vm316, %v337, 0.0
      %v342 = vrot.slane %v341, 4
      %v343 = vadd.f32 %v341, %v342
      %v344 = vrot.slane %v343, 2
      %v345 = vadd.f32 %v343, %v344
      %v346 = vrot.slane %v345, 1
      %v347 = vadd.f32 %v345, %v346
      %v348 = vsel %vm316, %v339, 0.0
      %v349 = vrot.slane %v348, 4
      %v350 = vadd.f32 %v348, %v349
      %v351 = vrot.slane %v350, 2
      %v352 = vadd.f32 %v350, %v351
      %v353 = vrot.slane %v352, 1
      %v354 = vadd.f32 %v352, %v353
      %v355 = vlog2.pop %v347
      %v356 = vmul.f32 %v355, 0.6931472
      %v357 = vlog2.pop %v354
      %v358 = vmul.f32 %v357, 0.6931472
      %v359 = vadd.f32 %v323, %v356
      %v360 = vadd.f32 %v330, %v358
      %v361 = vlaneseq
      %v362 = vshrl.u32 %v361, 7
      %v363 = vsub.s32 0, %v362
      %v364 = vrot.slane %v311, %v363
      %v365 = vlaneseq
      %v366 = vshrl.u32 %v365, 7
      %v367 = vsub.s32 2, %v366
      %v368 = vrot.slane %v311, %v367
      %v369 = vlaneseq
      %v370 = vshrl.u32 %v369, 7
      %v371 = vsub.s32 0, %v370
      %v372 = vrot.slane %v364, %v371
      %v373 = vlaneseq
      %v374 = vshrl.u32 %v373, 7
      %v375 = vsub.s32 0, %v374
      %v376 = vrot.slane %v368, %v375
      %vm377 = vcmp.eq.s32.totalorder %v310, %v372
      %vm378 = vcmp.eq.s32.totalorder %v310, %v376
      %v379 = vsel %vm377, %v312, 0.0
      %v380 = vsel %vm378, %v314, 0.0
      %v381 = vsel %vm316, %v379, 0.0
      %v382 = vrot.slane %v381, 4
      %v383 = vadd.f32 %v381, %v382
      %v384 = vrot.slane %v383, 2
      %v385 = vadd.f32 %v383, %v384
      %v386 = vrot.slane %v385, 1
      %v387 = vadd.f32 %v385, %v386
      %v388 = vsel %vm316, %v380, 0.0
      %v389 = vrot.slane %v388, 4
      %v390 = vadd.f32 %v388, %v389
      %v391 = vrot.slane %v390, 2
      %v392 = vadd.f32 %v390, %v391
      %v393 = vrot.slane %v392, 1
      %v394 = vadd.f32 %v392, %v393
      %v395 = vsub.f32 %v359, %v387
      %v396 = vsub.f32 %v360, %v394
      %vm397 = vcmp.eq.f32.partialorder %v312, %v333
      %v399 = vunpack.c.l.s4 839922192
      %v400 = vunpack.c.0.s8 %v399
      %v401 = vlaneseq
      %v402 = vshrl.u32 %v401, 7
      %v403 = vsub.s32 %v400, %v402
      %v404 = vrot.slane %v310, %v403
      %v405 = vsel %vm397, %v404, 4
      %v406 = vcombine.high %v405, %v405
      %v407 = vsel %vm316, %v405, 2147483647
      %v408 = vrot.slane %v407, 4
      %vm409 = vcmp.lt.s32.totalorder %v407, %v408
      %v410 = vsel %vm409, %v407, %v408
      %v411 = vrot.slane %v410, 2
      %vm412 = vcmp.lt.s32.totalorder %v410, %v411
      %v413 = vsel %vm412, %v410, %v411
      %v414 = vrot.slane %v413, 1
      %vm415 = vcmp.lt.s32.totalorder %v413, %v414
      %v416 = vsel %vm415, %v413, %v414
      %v417 = vsel %vm316, %v406, 2147483647
      %v418 = vrot.slane %v417, 4
      %vm419 = vcmp.lt.s32.totalorder %v417, %v418
      %v420 = vsel %vm419, %v417, %v418
      %v421 = vrot.slane %v420, 2
      %vm422 = vcmp.lt.s32.totalorder %v420, %v421
      %v423 = vsel %vm422, %v420, %v421
      %v424 = vrot.slane %v423, 1
      %vm425 = vcmp.lt.s32.totalorder %v423, %v424
      %v426 = vsel %vm425, %v423, %v424
      %vm427 = vcmp.eq.s32.totalorder %v310, %v416
      %vm428 = vcmp.eq.s32.totalorder %v310, %v426
      %v429 = vadd.f32 %v395, %v396
      %430 = vadd.xlane.f32.xlu0 %v429
      %v431 = vpop.xlane.xlu0 %430
      %vm432 = vmand %vm427, %vm377
      %vm433 = vmand %vm428, %vm378
      %v434 = vsel %vm432, 1.0, 0.0
      %v435 = vsel %vm433, 1.0, 0.0
      %v436 = vsel %vm316, %v434, 0.0
      %v437 = vsel %vm316, %v435, 0.0
      %v438 = vadd.f32 %v436, %v437
      %439 = vadd.xlane.f32.xlu0 %v438
      %v440 = vpop.xlane.xlu0 %439
      %v441 = vsel %vm427, 1.0, 0.0
      %v442 = vsel %vm428, 1.0, 0.0
      %v443 = vsel %vm316, %v441, 0.0
      %v444 = vsel %vm316, %v442, 0.0
      %v445 = vadd.f32 %v443, %v444
      %446 = vadd.xlane.f32.xlu0 %v445
      %v447 = vpop.xlane.xlu0 %446
      %v448 = vsel %vm377, 1.0, 0.0
      %v449 = vsel %vm378, 1.0, 0.0
      %v450 = vsel %vm316, %v448, 0.0
      %v451 = vsel %vm316, %v449, 0.0
      %v452 = vadd.f32 %v450, %v451
      %453 = vadd.xlane.f32.xlu0 %v452
      %v454 = vpop.xlane.xlu0 %453
      %vm455 = vcmp.eq.s32.totalorder %v310, 0
      %v456 = vsel %vm455, %v431, 0.0
      %vm457 = vcmask 7168
      %v458 = vsel %vm457, %v440, %v447
      %vm459 = vcmask 15360
      %v460 = vsel %vm459, %v458, %v454
      %vm461 = vcmask 23552
      %v462 = vsel %vm461, %v460, %v456
      %v463 = vld [vmem:[#allocation2] sm:$0xf]
      %v464 = vadd.f32 %v463, %v462
      %vm465 = vcmask 27648
      %466 = vst.msk [vmem:[#allocation2] sm:$0xf] %vm465, %v464
      %v467 = vld [vmem:[%s281] sm:$0xff]
      %v469 = vcombine.high %v467, %v467
      %v471 = vsel %vm316, %v467, -inf
      %v472 = vrot.slane %v471, 4
      %v473 = vmax.f32 %v471, %v472
      %v474 = vrot.slane %v473, 2
      %v475 = vmax.f32 %v473, %v474
      %v476 = vrot.slane %v475, 1
      %v477 = vmax.f32 %v475, %v476
      %v478 = vsel %vm316, %v469, -inf
      %v479 = vrot.slane %v478, 4
      %v480 = vmax.f32 %v478, %v479
      %v481 = vrot.slane %v480, 2
      %v482 = vmax.f32 %v480, %v481
      %v483 = vrot.slane %v482, 1
      %v484 = vmax.f32 %v482, %v483
      %v487 = vcombine.low %v477, %v484
      %v489 = vsub.f32 %v467, %v487
      %v490 = vmul.f32 %v489, 1.442695
      %v491 = vpow.pop %v490
      %v493 = vcombine.high %v491, %v491
      %v495 = vsel %vm316, %v491, 0.0
      %v496 = vrot.slane %v495, 4
      %v497 = vadd.f32 %v495, %v496
      %v498 = vrot.slane %v497, 2
      %v499 = vadd.f32 %v497, %v498
      %v500 = vrot.slane %v499, 1
      %v501 = vadd.f32 %v499, %v500
      %v502 = vsel %vm316, %v493, 0.0
      %v503 = vrot.slane %v502, 4
      %v504 = vadd.f32 %v502, %v503
      %v505 = vrot.slane %v504, 2
      %v506 = vadd.f32 %v504, %v505
      %v507 = vrot.slane %v506, 1
      %v508 = vadd.f32 %v506, %v507
      %v509 = vlog2.pop %v501
      %v510 = vmul.f32 %v509, 0.6931472
      %v511 = vlog2.pop %v508
      %v512 = vmul.f32 %v511, 0.6931472
      %v513 = vadd.f32 %v477, %v510
      %v514 = vadd.f32 %v484, %v512
      %v515 = vlaneseq
      %v516 = vshrl.u32 %v515, 7
      %v517 = vsub.s32 1, %v516
      %v518 = vrot.slane %v311, %v517
      %v519 = vlaneseq
      %v520 = vshrl.u32 %v519, 7
      %v521 = vsub.s32 3, %v520
      %v522 = vrot.slane %v311, %v521
      %v523 = vlaneseq
      %v524 = vshrl.u32 %v523, 7
      %v525 = vsub.s32 1, %v524
      %v526 = vrot.slane %v518, %v525
      %v527 = vlaneseq
      %v528 = vshrl.u32 %v527, 7
      %v529 = vsub.s32 1, %v528
      %v530 = vrot.slane %v522, %v529
      %vm531 = vcmp.eq.s32.totalorder %v310, %v526
      %vm532 = vcmp.eq.s32.totalorder %v310, %v530
      %v533 = vsel %vm531, %v467, 0.0
      %v534 = vsel %vm532, %v469, 0.0
      %v535 = vsel %vm316, %v533, 0.0
      %v536 = vrot.slane %v535, 4
      %v537 = vadd.f32 %v535, %v536
      %v538 = vrot.slane %v537, 2
      %v539 = vadd.f32 %v537, %v538
      %v540 = vrot.slane %v539, 1
      %v541 = vadd.f32 %v539, %v540
      %v542 = vsel %vm316, %v534, 0.0
      %v543 = vrot.slane %v542, 4
      %v544 = vadd.f32 %v542, %v543
      %v545 = vrot.slane %v544, 2
      %v546 = vadd.f32 %v544, %v545
      %v547 = vrot.slane %v546, 1
      %v548 = vadd.f32 %v546, %v547
      %v549 = vsub.f32 %v513, %v541
      %v550 = vsub.f32 %v514, %v548
      %vm551 = vcmp.eq.f32.partialorder %v467, %v487
      %v552 = vsel %vm551, %v404, 4
      %v553 = vcombine.high %v552, %v552
      %v554 = vsel %vm316, %v552, 2147483647
      %v555 = vrot.slane %v554, 4
      %vm556 = vcmp.lt.s32.totalorder %v554, %v555
      %v557 = vsel %vm556, %v554, %v555
      %v558 = vrot.slane %v557, 2
      %vm559 = vcmp.lt.s32.totalorder %v557, %v558
      %v560 = vsel %vm559, %v557, %v558
      %v561 = vrot.slane %v560, 1
      %vm562 = vcmp.lt.s32.totalorder %v560, %v561
      %v563 = vsel %vm562, %v560, %v561
      %v564 = vsel %vm316, %v553, 2147483647
      %v565 = vrot.slane %v564, 4
      %vm566 = vcmp.lt.s32.totalorder %v564, %v565
      %v567 = vsel %vm566, %v564, %v565
      %v568 = vrot.slane %v567, 2
      %vm569 = vcmp.lt.s32.totalorder %v567, %v568
      %v570 = vsel %vm569, %v567, %v568
      %v571 = vrot.slane %v570, 1
      %vm572 = vcmp.lt.s32.totalorder %v570, %v571
      %v573 = vsel %vm572, %v570, %v571
      %vm574 = vcmp.eq.s32.totalorder %v310, %v563
      %vm575 = vcmp.eq.s32.totalorder %v310, %v573
      %v576 = vadd.f32 %v549, %v550
      %577 = vadd.xlane.f32.xlu0 %v576
      %v578 = vpop.xlane.xlu0 %577
      %vm579 = vmand %vm574, %vm531
      %vm580 = vmand %vm575, %vm532
      %v581 = vsel %vm579, 1.0, 0.0
      %v582 = vsel %vm580, 1.0, 0.0
      %v583 = vsel %vm316, %v581, 0.0
      %v584 = vsel %vm316, %v582, 0.0
      %v585 = vadd.f32 %v583, %v584
      %586 = vadd.xlane.f32.xlu0 %v585
      %v587 = vpop.xlane.xlu0 %586
      %v588 = vsel %vm574, 1.0, 0.0
      %v589 = vsel %vm575, 1.0, 0.0
      %v590 = vsel %vm316, %v588, 0.0
      %v591 = vsel %vm316, %v589, 0.0
      %v592 = vadd.f32 %v590, %v591
      %593 = vadd.xlane.f32.xlu0 %v592
      %v594 = vpop.xlane.xlu0 %593
      %v595 = vsel %vm531, 1.0, 0.0
      %v596 = vsel %vm532, 1.0, 0.0
      %v597 = vsel %vm316, %v595, 0.0
      %v598 = vsel %vm316, %v596, 0.0
      %v599 = vadd.f32 %v597, %v598
      %600 = vadd.xlane.f32.xlu0 %v599
      %v601 = vpop.xlane.xlu0 %600
      %v602 = vsel %vm455, %v578, 0.0
      %v603 = vsel %vm457, %v587, %v594
      %v604 = vsel %vm459, %v603, %v601
      %v605 = vsel %vm461, %v604, %v602
      %s606 = scalar_lea.vmem [#allocation2], 4
      %v607 = vld [vmem:[%s606] sm:$0xf]
      %v608 = vadd.f32 %v607, %v605
      %609 = vst.msk [vmem:[%s606] sm:$0xf] %vm465, %v608
      // Predicated region
      $region37: #{ce_dice_loss.1} parent=31 // pred_check
        %p610 = pneg %p302
      $region38: #{ce_dice_loss.1} parent=31 // pred_check_branch
        %612 = sbr.rel (%p610) target = $region40
      $region39: #{ce_dice_loss.1} parent=31 // pred_region
        %v613 = vld [vmem:[#allocation2] sm:$0xf]
        %v614 = vld [vmem:[#allocation2 + $0x4] sm:$0xf]
        %v615 = vlaneseq
        %v616 = vand.u32 %v615, 127
        %v617 = vadd.s32 %v310, 1
        %vm618 = vcmp.eq.s32.totalorder %v616, %v617
        %620 = vset.pattern.permute.xlu0 0
        %621 = vperm.xlu0 %620, %v613
        %v622 = vpop.permute.xlu0 %621
        %v624 = vsel %vm618, %v622, 0.0
        %v625 = vadd.s32 %v617, 4
        %vm626 = vcmp.eq.s32.totalorder %v616, %v625
        %627 = vset.pattern.permute.xlu0 1
        %628 = vperm.xlu0 %627, %v613
        %v629 = vpop.permute.xlu0 %628
        %v631 = vsel %vm626, %v629, 0.0
        %v632 = vadd.f32 %v624, %v631
        %v633 = vadd.s32 %v617, 8
        %vm634 = vcmp.eq.s32.totalorder %v616, %v633
        %635 = vset.pattern.permute.xlu0 2
        %636 = vperm.xlu0 %635, %v613
        %v637 = vpop.permute.xlu0 %636
        %v639 = vsel %vm634, %v637, 0.0
        %v640 = vadd.f32 %v632, %v639
        %v641 = vsel %vm316, %v640, 0.0
        %v642 = vrot.slane %v641, 4
        %v643 = vadd.f32 %v641, %v642
        %v644 = vrot.slane %v643, 2
        %v645 = vadd.f32 %v643, %v644
        %v646 = vrot.slane %v645, 1
        %v647 = vadd.f32 %v645, %v646
        %vm648 = vcmp.eq.s32.totalorder %v616, 0
        %649 = vset.pattern.permute.xlu0 3
        %650 = vperm.xlu0 %649, %v613
        %v651 = vpop.permute.xlu0 %650
        %v653 = vsel %vm648, %v651, 0.0
        %v654 = vadd.f32 %v647, %v653
        %656 = vset.pattern.permute.xlu0 0
        %657 = vperm.xlu0 %656, %v614
        %v658 = vpop.permute.xlu0 %657
        %v660 = vsel %vm618, %v658, 0.0
        %661 = vset.pattern.permute.xlu0 1
        %662 = vperm.xlu0 %661, %v614
        %v663 = vpop.permute.xlu0 %662
        %v665 = vsel %vm626, %v663, 0.0
        %v666 = vadd.f32 %v660, %v665
        %667 = vset.pattern.permute.xlu0 2
        %668 = vperm.xlu0 %667, %v614
        %v669 = vpop.permute.xlu0 %668
        %v671 = vsel %vm634, %v669, 0.0
        %v672 = vadd.f32 %v666, %v671
        %v673 = vsel %vm316, %v672, 0.0
        %v674 = vrot.slane %v673, 4
        %v675 = vadd.f32 %v673, %v674
        %v676 = vrot.slane %v675, 2
        %v677 = vadd.f32 %v675, %v676
        %v678 = vrot.slane %v677, 1
        %v679 = vadd.f32 %v677, %v678
        %680 = vset.pattern.permute.xlu0 3
        %681 = vperm.xlu0 %680, %v614
        %v682 = vpop.permute.xlu0 %681
        %v684 = vsel %vm648, %v682, 0.0
        %v685 = vadd.f32 %v679, %v684
        %v686 = vlaneseq
        %v687 = vshrl.u32 %v686, 7
        %v688 = vsub.s32 0, %v687
        %v689 = vrot.slane %v654, %v688
        %v690 = vlaneseq
        %v691 = vshrl.u32 %v690, 7
        %v692 = vsub.s32 0, %v691
        %v693 = vrot.slane %v685, %v692
        %v694 = vsel %vm455, %v689, %v693
        %695 = vst [vmem:[%s300] sm:$0x3] %v694
      $region40: #{ce_dice_loss.1} parent=31 // pred_fallthru
        _
      %s696 = sadd.s32 %s19, %s20
      %p697 = scmp.lt.s32.totalorder %s696, 1
      %s698 = scalar_select %p697, %s696, 1
      %s699 = smul.addr %s698, 2
      %s700 = scalar_lea.vmem %s3, %s699
      // Predicated region
      $region41: #{ce_dice_loss.1} parent=31 // pred_check
        %p701 = pneg %p143
      $region42: #{ce_dice_loss.1} parent=31 // pred_check_branch
        %703 = sbr.rel (%p701) target = $region44
      $region43: #{ce_dice_loss.1} parent=31 // pred_region
        %s704 = sadd.s32 %s19, %s20
      $region44: #{ce_dice_loss.1} parent=31 // pred_fallthru
        _
    $region32: #{ce_dice_loss.1} parent=5 // pred_fallthru
      _
    %p705 = scmp.le.s32.totalorder 2, %s9
    // Predicated region
    $region45: #{ce_dice_loss.1} parent=5 // pred_check
      %p706 = pneg %p705
    $region46: #{ce_dice_loss.1} parent=5 // pred_check_branch
      %708 = sbr.rel (%p706) target = $region48
    $region47: #{ce_dice_loss.1} parent=5 // pred_region
      %s709 = ssub.s32 %s9, 2
      // Predicated region
      $region49: #{ce_dice_loss.1} parent=47 // pred_check
        %p710 = pneg %p149
      $region50: #{ce_dice_loss.1} parent=47 // pred_check_branch
        %712 = sbr.rel (%p710) target = $region52
      $region51: #{ce_dice_loss.1} parent=47 // pred_region
        %s713 = sadd.s32 %s22, %s23
        %p714 = scmp.lt.s32.totalorder %s713, 1
        %s715 = scalar_select %p714, %s713, 1
        %s716 = smul.addr %s715, 2
        %s717 = scalar_lea.vmem %s3, %s716
      $region52: #{ce_dice_loss.1} parent=47 // pred_fallthru
        _
    $region48: #{ce_dice_loss.1} parent=5 // pred_fallthru
      _
  $region6: #{ce_dice_loss.1} parent=0 // loop_footer
    %s13 = sadd.s32 1, %s9
  $region7: #{ce_dice_loss.1} parent=0 // loop_footer_branch
    %8 = sbr.rel target = $region3
  $region8: #{ce_dice_loss.1} parent=0 // loop_exit
    _

</llo_original>
